<compile_context>
chip_gen: v5e
topology: v5e:2x2
jax: 0.10.0
libtpu: 0.0.40
codegen_flags: <defaults>
</compile_context>

<pallas_src>
import math

import jax
import jax.numpy as jnp
from jax.experimental import pallas as pl
from jax.experimental.pallas import tpu as pltpu

_LANE = 128            # TPU lane width: hidden dims are padded to this
_MAX_BATCH_TILE = 4096  # max batch tile for the batched / learner path
_SMALL_BATCH = 8        # at or below this, plain jnp beats a pallas_call


def qnetwork_kernel(x_ref, w1_ref, b1_ref, w2_ref, b2_ref, w3_ref, b3_ref,
                    out_ref):
    """Fused 3-layer MLP: Linear -> ReLU -> [dropout=id] -> Linear -> ReLU -> Linear."""
    x = x_ref[...]

    # Layer 1 + ReLU (MXU matmul, f32 accumulation). Hidden width is padded
    # to 128, so h1 is lane-dense.
    h1 = jnp.dot(x, w1_ref[...], preferred_element_type=jnp.float32)
    h1 = jnp.maximum(h1 + b1_ref[...], 0.0)

    # Dropout: identity in eval mode.

    # Layer 2 + ReLU (clean 128x128 tile).
    h2 = jnp.dot(h1, w2_ref[...], preferred_element_type=jnp.float32)
    h2 = jnp.maximum(h2 + b2_ref[...], 0.0)

    # Layer 3 (Q-value head, no activation). Stored at its true width
    # (num_actions), not lane-padded -> ~21x less output HBM traffic.
    out = jnp.dot(h2, w3_ref[...], preferred_element_type=jnp.float32)
    out_ref[...] = (out + b3_ref[...]).astype(out_ref.dtype)


def _round_up(v, m):
    return ((v + m - 1) // m) * m


def prepare_qnetwork_params(params):
    """One-time conversion from PyTorch nn.Linear layout to kernel layout.

    PyTorch layout:  w_k: (out_k, in_k), b_k: (out_k,)
    Kernel layout:   w_k: (in_k, out_k), b_k: (1, out_k),
                     hidden widths zero-padded to a multiple of 128
                     (ReLU(0)=0 and zero weight rows keep the math exact).
                     The action head keeps its true width (no output padding).

    Call this ONCE (e.g. right after loading / updating target-net weights),
    not inside the per-step forward.
    """
    w1 = jnp.asarray(params["w1"]).T            # (dim_obs, h0)
    w2 = jnp.asarray(params["w2"]).T            # (h0, h1)
    w3 = jnp.asarray(params["w3"]).T            # (h1, num_actions)
    b1 = jnp.asarray(params["b1"])[None, :]     # (1, h0)
    b2 = jnp.asarray(params["b2"])[None, :]     # (1, h1)
    b3 = jnp.asarray(params["b3"])[None, :]     # (1, num_actions)

    h0, h1 = w1.shape[1], w2.shape[1]
    h0p, h1p = _round_up(h0, _LANE), _round_up(h1, _LANE)

    if h0p != h0:
        w1 = jnp.pad(w1, ((0, 0), (0, h0p - h0)))      # extra cols -> 0
        b1 = jnp.pad(b1, ((0, 0), (0, h0p - h0)))
        w2 = jnp.pad(w2, ((0, h0p - h0), (0, 0)))      # extra rows -> 0
    if h1p != h1:
        w2 = jnp.pad(w2, ((0, 0), (0, h1p - h1)))
        b2 = jnp.pad(b2, ((0, 0), (0, h1p - h1)))
        w3 = jnp.pad(w3, ((0, h1p - h1), (0, 0)))

    return {"w1": w1, "b1": b1, "w2": w2, "b2": b2, "w3": w3, "b3": b3}


def _pick_batch_tile(B):
    """Static (trace-time) batch-tile choice.

    - B <= 8: single full-array tile (block == full dim is always legal).
    - else : at least 2 grid steps (so v7x's 2 TensorCores both get work via
      the "parallel" semantic), tile = round_up(cdiv(B, n_steps), 8) capped at
      _MAX_BATCH_TILE, sized so evenly divisible batches split into equal
      tiles (no masked partial writeback).
    """
    if B <= _SMALL_BATCH:
        return B
    n_steps = max(2, pl.cdiv(B, _MAX_BATCH_TILE))
    tb = _round_up(pl.cdiv(B, n_steps), 8)
    return min(tb, _MAX_BATCH_TILE)


def _qnetwork_forward_impl(x, p):
    """x: (B, dim_observation) f32; p: output of prepare_qnetwork_params."""
    w1, b1 = p["w1"], p["b1"]
    w2, b2 = p["w2"], p["b2"]
    w3, b3 = p["w3"], p["b3"]

    B, dim_obs = x.shape
    num_actions = w3.shape[1]

    tb = _pick_batch_tile(B)
    grid = (pl.cdiv(B, tb),)

    # Weights/biases: index_map always (0, 0) -> resident in VMEM across all
    # batch tiles (no re-DMA between consecutive grid steps).
    resident = lambda a: pl.BlockSpec(a.shape, lambda i: (0, 0))

    return pl.pallas_call(
        qnetwork_kernel,
        out_shape=jax.ShapeDtypeStruct((B, num_actions), x.dtype),
        grid=grid,
        in_specs=[
            pl.BlockSpec((tb, dim_obs), lambda i: (i, 0)),   # x: batch-tiled
            resident(w1), resident(b1),
            resident(w2), resident(b2),
            resident(w3), resident(b3),
        ],
        # Unpadded output block: last dim (num_actions) equals the full array
        # dim, so this is a legal BlockSpec; masked vst is cheap vs. writing a
        # 128-wide padded head.
        out_specs=pl.BlockSpec((tb, num_actions), lambda i: (i, 0)),
        compiler_params=pltpu.CompilerParams(
            # Batch axis is independent -> shards across the 2 TensorCores on
            # v7x (grid has >=2 steps for B>8); harmless no-op on v5e/v6e.
            dimension_semantics=("parallel",)),
    )(x, w1, b1, w2, b2, w3, b3)


# jit the Pallas forward into a single dispatch.
qnetwork_forward = jax.jit(_qnetwork_forward_impl)


def _qnetwork_forward_jnp(x, p):
    """Plain jnp forward on prepped params (acting path, tiny batches)."""
    h1 = jnp.maximum(x @ p["w1"] + p["b1"], 0.0)
    h2 = jnp.maximum(h1 @ p["w2"] + p["b2"], 0.0)
    return h2 @ p["w3"] + p["b3"]


_qnetwork_forward_jnp_jit = jax.jit(_qnetwork_forward_jnp)


def qnetwork_forward_auto(x, p):
    """Dispatch: tiny (acting-path) batches skip the kernel entirely — at B=2
    a pallas_call is 100% launch/DMA overhead."""
    if x.shape[0] <= _SMALL_BATCH:
        return _qnetwork_forward_jnp_jit(x, p)
    return qnetwork_forward(x, p)


def init_qnetwork_params(key, dim_observation, num_actions,
                         hidden_sizes=(120, 84)):
    """Deterministic init mimicking PyTorch nn.Linear defaults
    (uniform(-1/sqrt(fan_in), 1/sqrt(fan_in))), in PyTorch layout."""
    sizes = [dim_observation, hidden_sizes[0], hidden_sizes[1], num_actions]
    params = {}
    for i in range(3):
        fan_in, fan_out = sizes[i], sizes[i + 1]
        bound = 1.0 / math.sqrt(fan_in)
        key, kw, kb = jax.random.split(key, 3)
        params[f"w{i+1}"] = jax.random.uniform(
            kw, (fan_out, fan_in), jnp.float32, -bound, bound)
        params[f"b{i+1}"] = jax.random.uniform(
            kb, (fan_out,), jnp.float32, -bound, bound)
    return params


def qnetwork_ref(x, params):
    """Pure-JAX reference (eval mode), PyTorch-layout params."""
    h1 = jnp.maximum(x @ params["w1"].T + params["b1"], 0.0)
    h2 = jnp.maximum(h1 @ params["w2"].T + params["b2"], 0.0)
    return h2 @ params["w3"].T + params["b3"]


if __name__ == "__main__":
    key = jax.random.PRNGKey(0)
    k_params, k_x1, k_x2, k_x3 = jax.random.split(key, 4)

    batch = 2
    dim_observation = 8
    num_actions = 6
    hidden_sizes = (120, 84)

    params = init_qnetwork_params(k_params, dim_observation, num_actions,
                                  hidden_sizes)
    # One-time layout conversion + hidden-dim padding (hoisted out of the
    # per-step forward).
    prepped = prepare_qnetwork_params(params)

    # --- small (acting-path) batch, run through the Pallas kernel to verify
    #     the single-full-tile path ---
    x = jax.random.normal(k_x1, (batch, dim_observation), jnp.float32)
    out = jax.block_until_ready(qnetwork_forward(x, prepped))
    ref = qnetwork_ref(x, params)
    assert out.shape == (batch, num_actions), out.shape
    assert jnp.allclose(out, ref, atol=1e-5, rtol=1e-5), \
        f"max abs err = {jnp.max(jnp.abs(out - ref))}"

    # --- learner-path batch: exercises the batch grid (640 -> 2 x 320 equal
    #     tiles, both v7x TensorCores active) with resident weights ---
    big_batch = 640
    xb = jax.random.normal(k_x2, (big_batch, dim_observation), jnp.float32)
    outb = jax.block_until_ready(qnetwork_forward(xb, prepped))
    refb = qnetwork_ref(xb, params)
    assert outb.shape == (big_batch, num_actions), outb.shape
    assert jnp.allclose(outb, refb, atol=1e-5, rtol=1e-5), \
        f"max abs err = {jnp.max(jnp.abs(outb - refb))}"

    # --- non-dividing batch: exercises the masked partial last tile ---
    odd_batch = 700
    xc = jax.random.normal(k_x3, (odd_batch, dim_observation), jnp.float32)
    outc = jax.block_until_ready(qnetwork_forward(xc, prepped))
    refc = qnetwork_ref(xc, params)
    assert outc.shape == (odd_batch, num_actions), outc.shape
    assert jnp.allclose(outc, refc, atol=1e-5, rtol=1e-5), \
        f"max abs err = {jnp.max(jnp.abs(outc - refc))}"

    # --- auto-dispatch (acting path uses plain jnp, same numerics) ---
    out_auto = jax.block_until_ready(qnetwork_forward_auto(x, prepped))
    assert jnp.allclose(out_auto, ref, atol=1e-5, rtol=1e-5)

    print("KERNEL_OK")
</pallas_src>

<mosaic_0001>
module attributes {stable_mosaic.version = 11 : i64} {
  func.func @qnetwork_kernel(%arg0: i32, %arg1: memref<2x8xf32, #tpu.memory_space<vmem>>, %arg2: memref<8x128xf32, #tpu.memory_space<vmem>>, %arg3: memref<1x128xf32, #tpu.memory_space<vmem>>, %arg4: memref<128x128xf32, #tpu.memory_space<vmem>>, %arg5: memref<1x128xf32, #tpu.memory_space<vmem>>, %arg6: memref<128x6xf32, #tpu.memory_space<vmem>>, %arg7: memref<1x6xf32, #tpu.memory_space<vmem>>, %arg8: memref<2x6xf32, #tpu.memory_space<vmem>>) attributes {dimension_semantics = [#tpu.dimension_semantics<parallel>], iteration_bounds = array<i64: 1>, scalar_prefetch = 0 : i64, scratch_operands = 0 : i64, tpu.core_type = #tpu.core_type<tc>, window_params = [{transform_indices = @transform_0, window_bounds = array<i64: 2, 8>}, {pipeline_mode = #tpu.pipeline_mode<synchronous>, transform_indices = @transform_1, window_bounds = array<i64: 8, 128>}, {pipeline_mode = #tpu.pipeline_mode<synchronous>, transform_indices = @transform_2, window_bounds = array<i64: 1, 128>}, {pipeline_mode = #tpu.pipeline_mode<synchronous>, transform_indices = @transform_3, window_bounds = array<i64: 128, 128>}, {pipeline_mode = #tpu.pipeline_mode<synchronous>, transform_indices = @transform_4, window_bounds = array<i64: 1, 128>}, {pipeline_mode = #tpu.pipeline_mode<synchronous>, transform_indices = @transform_5, window_bounds = array<i64: 128, 6>}, {pipeline_mode = #tpu.pipeline_mode<synchronous>, transform_indices = @transform_6, window_bounds = array<i64: 1, 6>}, {transform_indices = @transform_7, window_bounds = array<i64: 2, 6>}]} {
    %c0 = arith.constant 0 : index
    %c0_0 = arith.constant 0 : index
    %0 = vector.load %arg1[%c0, %c0_0] : memref<2x8xf32, #tpu.memory_space<vmem>>, vector<2x8xf32>
    %c0_1 = arith.constant 0 : index
    %c0_2 = arith.constant 0 : index
    %1 = vector.load %arg2[%c0_1, %c0_2] : memref<8x128xf32, #tpu.memory_space<vmem>>, vector<8x128xf32>
    %cst = arith.constant dense<0.000000e+00> : vector<2x128xf32>
    %2 = tpu.matmul %0, %1, %cst {dimension_numbers = #tpu.dot_dimension_numbers<[1], [0], [0], [1], [0, 0, 1, 1], [], []>} : vector<2x8xf32>, vector<8x128xf32>, vector<2x128xf32> -> vector<2x128xf32>
    %c0_3 = arith.constant 0 : index
    %c0_4 = arith.constant 0 : index
    %3 = vector.load %arg3[%c0_3, %c0_4] : memref<1x128xf32, #tpu.memory_space<vmem>>, vector<1x128xf32>
    %4 = vector.broadcast %3 : vector<1x128xf32> to vector<2x128xf32>
    %5 = arith.addf %2, %4 : vector<2x128xf32>
    %cst_5 = arith.constant 0.000000e+00 : f32
    %6 = vector.broadcast %cst_5 : f32 to vector<2x128xf32>
    %7 = arith.maximumf %5, %6 : vector<2x128xf32>
    %c0_6 = arith.constant 0 : index
    %c0_7 = arith.constant 0 : index
    %8 = vector.load %arg4[%c0_6, %c0_7] : memref<128x128xf32, #tpu.memory_space<vmem>>, vector<128x128xf32>
    %cst_8 = arith.constant dense<0.000000e+00> : vector<2x128xf32>
    %9 = tpu.matmul %7, %8, %cst_8 {dimension_numbers = #tpu.dot_dimension_numbers<[1], [0], [0], [1], [0, 0, 1, 1], [], []>} : vector<2x128xf32>, vector<128x128xf32>, vector<2x128xf32> -> vector<2x128xf32>
    %c0_9 = arith.constant 0 : index
    %c0_10 = arith.constant 0 : index
    %10 = vector.load %arg5[%c0_9, %c0_10] : memref<1x128xf32, #tpu.memory_space<vmem>>, vector<1x128xf32>
    %11 = vector.broadcast %10 : vector<1x128xf32> to vector<2x128xf32>
    %12 = arith.addf %9, %11 : vector<2x128xf32>
    %cst_11 = arith.constant 0.000000e+00 : f32
    %13 = vector.broadcast %cst_11 : f32 to vector<2x128xf32>
    %14 = arith.maximumf %12, %13 : vector<2x128xf32>
    %c0_12 = arith.constant 0 : index
    %c0_13 = arith.constant 0 : index
    %15 = vector.load %arg6[%c0_12, %c0_13] : memref<128x6xf32, #tpu.memory_space<vmem>>, vector<128x6xf32>
    %cst_14 = arith.constant dense<0.000000e+00> : vector<2x6xf32>
    %16 = tpu.matmul %14, %15, %cst_14 {dimension_numbers = #tpu.dot_dimension_numbers<[1], [0], [0], [1], [0, 0, 1, 1], [], []>} : vector<2x128xf32>, vector<128x6xf32>, vector<2x6xf32> -> vector<2x6xf32>
    %c0_15 = arith.constant 0 : index
    %c0_16 = arith.constant 0 : index
    %17 = vector.load %arg7[%c0_15, %c0_16] : memref<1x6xf32, #tpu.memory_space<vmem>>, vector<1x6xf32>
    %18 = vector.broadcast %17 : vector<1x6xf32> to vector<2x6xf32>
    %19 = arith.addf %16, %18 : vector<2x6xf32>
    %c0_17 = arith.constant 0 : index
    %c0_18 = arith.constant 0 : index
    %20 = vector.load %arg8[%c0_17, %c0_18] : memref<2x6xf32, #tpu.memory_space<vmem>>, vector<2x6xf32>
    tpu.vector_store %arg8[%c0_17, %c0_18], %19 {strides = array<i32>} : memref<2x6xf32, #tpu.memory_space<vmem>>, vector<2x6xf32>,
    return
  }
  func.func @transform_0(%arg0: i32) -> (i32, i32) {
    %c0_i32 = arith.constant 0 : i32
    %c0_i32_0 = arith.constant 0 : i32
    return %arg0, %c0_i32 : i32, i32
  }
  func.func @transform_1(%arg0: i32) -> (i32, i32) {
    %c0_i32 = arith.constant 0 : i32
    %c0_i32_0 = arith.constant 0 : i32
    %c0_i32_1 = arith.constant 0 : i32
    return %c0_i32, %c0_i32_0 : i32, i32
  }
  func.func @transform_2(%arg0: i32) -> (i32, i32) {
    %c0_i32 = arith.constant 0 : i32
    %c0_i32_0 = arith.constant 0 : i32
    %c0_i32_1 = arith.constant 0 : i32
    return %c0_i32, %c0_i32_0 : i32, i32
  }
  func.func @transform_3(%arg0: i32) -> (i32, i32) {
    %c0_i32 = arith.constant 0 : i32
    %c0_i32_0 = arith.constant 0 : i32
    %c0_i32_1 = arith.constant 0 : i32
    return %c0_i32, %c0_i32_0 : i32, i32
  }
  func.func @transform_4(%arg0: i32) -> (i32, i32) {
    %c0_i32 = arith.constant 0 : i32
    %c0_i32_0 = arith.constant 0 : i32
    %c0_i32_1 = arith.constant 0 : i32
    return %c0_i32, %c0_i32_0 : i32, i32
  }
  func.func @transform_5(%arg0: i32) -> (i32, i32) {
    %c0_i32 = arith.constant 0 : i32
    %c0_i32_0 = arith.constant 0 : i32
    %c0_i32_1 = arith.constant 0 : i32
    return %c0_i32, %c0_i32_0 : i32, i32
  }
  func.func @transform_6(%arg0: i32) -> (i32, i32) {
    %c0_i32 = arith.constant 0 : i32
    %c0_i32_0 = arith.constant 0 : i32
    %c0_i32_1 = arith.constant 0 : i32
    return %c0_i32, %c0_i32_0 : i32, i32
  }
  func.func @transform_7(%arg0: i32) -> (i32, i32) {
    %c0_i32 = arith.constant 0 : i32
    %c0_i32_0 = arith.constant 0 : i32
    return %arg0, %c0_i32 : i32, i32
  }
}

</mosaic_0001>

<llo_original>
// kernel: _qnetwork_forward_impl.1
$region0: #{_qnetwork_forward_impl.1}
  #allocation0 [shape = 'u32[]', space=smem, size = 0x4, offset = 0x4, fixed_abs, tag = 'smem constant byte address 0x4 - core index']
  #allocation1 [shape = 'u32[72,128]{1,0:T(1,128)}', space=vmem, size = 0x9000, scoped, tag = 'internal scratch']
  %s0 = inlined_call_operand.vmem [shape: f32[2,8], index: 0, kind: input, shape index: {}]
  %s1 = inlined_call_operand.vmem [shape: f32[8,128], index: 1, kind: input, shape index: {}]
  %s2 = inlined_call_operand.vmem [shape: f32[1,128], index: 2, kind: input, shape index: {}]
  %s3 = inlined_call_operand.vmem [shape: f32[128,128], index: 3, kind: input, shape index: {}]
  %s4 = inlined_call_operand.vmem [shape: f32[1,128], index: 4, kind: input, shape index: {}]
  %s5 = inlined_call_operand.vmem [shape: f32[128,6], index: 5, kind: input, shape index: {}]
  %s6 = inlined_call_operand.hbm [shape: f32[1,6], index: 6, kind: input, shape index: {}]
  %s7 = inlined_call_operand.hbm [shape: f32[2,6], index: 7, kind: output, shape index: {}]
  %s8 = sld [smem:[#allocation0]]
  $region42: #{_qnetwork_forward_impl.1} parent=0
    _
  %s10 = ssub.s32 1, %s8
  %s11 = scalar_select 0, %s10, %s8
  $region1: #{_qnetwork_forward_impl.1} parent=0
    #allocation2 [shape = 'u8[512]{0}', space=vmem, size = 0x400, scoped, tag = 'input window, operand 6, single buffered']
    #allocation3 [shape = 's32[1]{0}', space=sflag, size = 0x4, scoped, tag = 'scoped memory for _qnetwork_forward_impl.1']
    #allocation4 [shape = 's32[1]{0}', space=sflag, size = 0x4, scoped, tag = 'scoped memory for _qnetwork_forward_impl.1']
    #allocation5 [shape = 'u8[1024]{0}', space=vmem, size = 0x400, scoped, tag = 'output window, operand 0, single buffered']
    %12 = vsyncpa [#allocation3], 0
    %13 = vsyncpa [#allocation4], 0
    // Predicated region
    $region2: #{_qnetwork_forward_impl.1} parent=1 // pred_check
      _
    $region3: #{_qnetwork_forward_impl.1} parent=1 // pred_check_branch
      %15 = sbr.rel (0) target = $region5
    $region4: #{_qnetwork_forward_impl.1} parent=1 // pred_region
      _
    $region5: #{_qnetwork_forward_impl.1} parent=1 // pred_fallthru
      _
    // Predicated region
    $region6: #{_qnetwork_forward_impl.1} parent=1 // pred_check
      _
    $region7: #{_qnetwork_forward_impl.1} parent=1 // pred_check_branch
      %17 = sbr.rel (0) target = $region9
    $region8: #{_qnetwork_forward_impl.1} parent=1 // pred_region
      _
    $region9: #{_qnetwork_forward_impl.1} parent=1 // pred_fallthru
      _
    // Predicated region
    $region10: #{_qnetwork_forward_impl.1} parent=1 // pred_check
      _
    $region11: #{_qnetwork_forward_impl.1} parent=1 // pred_check_branch
      %19 = sbr.rel (0) target = $region13
    $region12: #{_qnetwork_forward_impl.1} parent=1 // pred_region
      _
    $region13: #{_qnetwork_forward_impl.1} parent=1 // pred_fallthru
      _
    // Predicated region
    $region14: #{_qnetwork_forward_impl.1} parent=1 // pred_check
      _
    $region15: #{_qnetwork_forward_impl.1} parent=1 // pred_check_branch
      %21 = sbr.rel (0) target = $region17
    $region16: #{_qnetwork_forward_impl.1} parent=1 // pred_region
      _
    $region17: #{_qnetwork_forward_impl.1} parent=1 // pred_fallthru
      _
    // Predicated region
    $region18: #{_qnetwork_forward_impl.1} parent=1 // pred_check
      _
    $region19: #{_qnetwork_forward_impl.1} parent=1 // pred_check_branch
      %23 = sbr.rel (0) target = $region21
    $region20: #{_qnetwork_forward_impl.1} parent=1 // pred_region
      _
    $region21: #{_qnetwork_forward_impl.1} parent=1 // pred_fallthru
      _
    // Predicated region
    $region22: #{_qnetwork_forward_impl.1} parent=1 // pred_check
      _
    $region23: #{_qnetwork_forward_impl.1} parent=1 // pred_check_branch
      %25 = sbr.rel (0) target = $region25
    $region24: #{_qnetwork_forward_impl.1} parent=1 // pred_region
      _
    $region25: #{_qnetwork_forward_impl.1} parent=1 // pred_fallthru
      _
    // Predicated region
    $region26: #{_qnetwork_forward_impl.1} parent=1 // pred_check
      _
    $region27: #{_qnetwork_forward_impl.1} parent=1 // pred_check_branch
      %27 = sbr.rel (0) target = $region29
    $region28: #{_qnetwork_forward_impl.1} parent=1 // pred_region
      %29 = vsyncadd [#allocation3], 0
      %s31 = sshll.u32 %s6, 4
      %s32 = int_to_ptr.hbm [resolvable:$true] %s31
      %s33 = sshll.u32 [#allocation2], 4
      %s34 = int_to_ptr.vmem [resolvable:$true] %s33
      %36 = dma.hbm_to_vmem [thread:$0]  %s32, 16, %s34, [#allocation3]
    $region29: #{_qnetwork_forward_impl.1} parent=1 // pred_fallthru
      _
    // Predicated region
    $region30: #{_qnetwork_forward_impl.1} parent=1 // pred_check
      _
    $region31: #{_qnetwork_forward_impl.1} parent=1 // pred_check_branch
      %38 = sbr.rel (0) target = $region33
    $region32: #{_qnetwork_forward_impl.1} parent=1 // pred_region
      %40 = dma.done [#allocation3], 16
    $region33: #{_qnetwork_forward_impl.1} parent=1 // pred_fallthru
      _
    %v41 = vld [vmem:[%s0] sm:$0x3]
    %v42 = vld [vmem:[%s1] sm:$0xff]
    %v43 = vld [vmem:[%s2] sm:$0x1]
    %v45 = vperm.slane %v43, 0
    %vm47 = vcmask 64512
    %v49 = vsel %vm47, %v41, 0
    %51 = vmatpush.msra.mxu0 0.0
    %52 = vmatpush.msra.mxu0 0.0
    %53 = vmatpush.msra.mxu0 0.0
    %54 = vmatpush.msra.mxu0 0.0
    %55 = vmatpush.msra.mxu0 0.0
    %56 = vmatpush.msra.mxu0 0.0
    %57 = vmatpush.msra.mxu0 0.0
    %58 = vmatpush.msra.mxu0 0.0
    %59 = vmatpush.msra.mxu0 0.0
    %60 = vmatpush.msra.mxu0 0.0
    %61 = vmatpush.msra.mxu0 0.0
    %62 = vmatpush.msra.mxu0 0.0
    %63 = vmatpush.msra.mxu0 0.0
    %64 = vmatpush.msra.mxu0 0.0
    %65 = vmatpush.msra.mxu0 0.0
    %66 = vmatpush.msra.mxu0 %v42
    %67 = vmatmul.f32.gmra.mxu0 %v49
    %v68 = vpop.f32.mrf.mxu0
    %v69 = vadd.f32 %v45, %v68
    %70 = vdwg.mxu0
    %v71 = vmax.f32 %v69, 0.0
    %v72 = vld [vmem:[%s3] sm:$0xff]
    %v73 = vld [vmem:[%s3 + $0x8] sm:$0xff]
    %v74 = vld [vmem:[%s3 + $0x10] sm:$0xff]
    %v75 = vld [vmem:[%s3 + $0x18] sm:$0xff]
    %v76 = vld [vmem:[%s3 + $0x20] sm:$0xff]
    %v77 = vld [vmem:[%s3 + $0x28] sm:$0xff]
    %v78 = vld [vmem:[%s3 + $0x30] sm:$0xff]
    %v79 = vld [vmem:[%s3 + $0x38] sm:$0xff]
    %v80 = vld [vmem:[%s3 + $0x40] sm:$0xff]
    %v81 = vld [vmem:[%s3 + $0x48] sm:$0xff]
    %v82 = vld [vmem:[%s3 + $0x50] sm:$0xff]
    %v83 = vld [vmem:[%s3 + $0x58] sm:$0xff]
    %v84 = vld [vmem:[%s3 + $0x60] sm:$0xff]
    %v85 = vld [vmem:[%s3 + $0x68] sm:$0xff]
    %v86 = vld [vmem:[%s3 + $0x70] sm:$0xff]
    %v87 = vld [vmem:[%s3 + $0x78] sm:$0xff]
    %v88 = vld [vmem:[%s4] sm:$0x1]
    %v90 = vperm.slane %v88, 0
    %92 = vmatpush.msra.mxu0 %v87
    %93 = vmatpush.msra.mxu0 %v86
    %94 = vmatpush.msra.mxu0 %v85
    %95 = vmatpush.msra.mxu0 %v84
    %96 = vmatpush.msra.mxu0 %v83
    %97 = vmatpush.msra.mxu0 %v82
    %98 = vmatpush.msra.mxu0 %v81
    %99 = vmatpush.msra.mxu0 %v80
    %100 = vmatpush.msra.mxu0 %v79
    %101 = vmatpush.msra.mxu0 %v78
    %102 = vmatpush.msra.mxu0 %v77
    %103 = vmatpush.msra.mxu0 %v76
    %104 = vmatpush.msra.mxu0 %v75
    %105 = vmatpush.msra.mxu0 %v74
    %106 = vmatpush.msra.mxu0 %v73
    %107 = vmatpush.msra.mxu0 %v72
    %108 = vmatmul.f32.gmra.mxu0 %v71
    %v109 = vpop.f32.mrf.mxu0
    %v110 = vadd.f32 %v90, %v109
    %111 = vdwg.mxu0
    %v112 = vmax.f32 %v110, 0.0
    %v113 = vld [vmem:[%s5] sm:$0xff]
    %v114 = vld [vmem:[%s5 + $0x8] sm:$0xff]
    %v115 = vld [vmem:[%s5 + $0x10] sm:$0xff]
    %v116 = vld [vmem:[%s5 + $0x18] sm:$0xff]
    %v117 = vld [vmem:[%s5 + $0x20] sm:$0xff]
    %v118 = vld [vmem:[%s5 + $0x28] sm:$0xff]
    %v119 = vld [vmem:[%s5 + $0x30] sm:$0xff]
    %v120 = vld [vmem:[%s5 + $0x38] sm:$0xff]
    %v121 = vld [vmem:[%s5 + $0x40] sm:$0xff]
    %v122 = vld [vmem:[%s5 + $0x48] sm:$0xff]
    %v123 = vld [vmem:[%s5 + $0x50] sm:$0xff]
    %v124 = vld [vmem:[%s5 + $0x58] sm:$0xff]
    %v125 = vld [vmem:[%s5 + $0x60] sm:$0xff]
    %v126 = vld [vmem:[%s5 + $0x68] sm:$0xff]
    %v127 = vld [vmem:[%s5 + $0x70] sm:$0xff]
    %v128 = vld [vmem:[%s5 + $0x78] sm:$0xff]
    %v129 = vld [vmem:[#allocation2] sm:$0x1]
    %v131 = vperm.slane %v129, 0
    %133 = vmatpush.msra.mxu0 %v128
    %134 = vmatpush.msra.mxu0 %v127
    %135 = vmatpush.msra.mxu0 %v126
    %136 = vmatpush.msra.mxu0 %v125
    %137 = vmatpush.msra.mxu0 %v124
    %138 = vmatpush.msra.mxu0 %v123
    %139 = vmatpush.msra.mxu0 %v122
    %140 = vmatpush.msra.mxu0 %v121
    %141 = vmatpush.msra.mxu0 %v120
    %142 = vmatpush.msra.mxu0 %v119
    %143 = vmatpush.msra.mxu0 %v118
    %144 = vmatpush.msra.mxu0 %v117
    %145 = vmatpush.msra.mxu0 %v116
    %146 = vmatpush.msra.mxu0 %v115
    %147 = vmatpush.msra.mxu0 %v114
    %148 = vmatpush.msra.mxu0 %v113
    %149 = vmatmul.f32.gmra.mxu0 %v112
    %v150 = vpop.f32.mrf.mxu0
    %v151 = vadd.f32 %v131, %v150
    %152 = vdwg.mxu0
    %vm153 = vcmask 41984
    %154 = vst.msk [vmem:[#allocation5] sm:$0x3] %vm153, %v151
    // Predicated region
    $region34: #{_qnetwork_forward_impl.1} parent=1 // pred_check
      _
    $region35: #{_qnetwork_forward_impl.1} parent=1 // pred_check_branch
      %156 = sbr.rel (0) target = $region37
    $region36: #{_qnetwork_forward_impl.1} parent=1 // pred_region
      %158 = vsyncadd [#allocation4], 0
      %s160 = sshll.u32 [#allocation5], 4
      %s161 = int_to_ptr.vmem [resolvable:$true] %s160
      %s162 = sshll.u32 %s7, 4
      %s163 = int_to_ptr.hbm [resolvable:$true] %s162
      %165 = dma.vmem_to_hbm [thread:$0]  %s161, 32, %s163, [#allocation4]
    $region37: #{_qnetwork_forward_impl.1} parent=1 // pred_fallthru
      _
    // Predicated region
    $region38: #{_qnetwork_forward_impl.1} parent=1 // pred_check
      _
    $region39: #{_qnetwork_forward_impl.1} parent=1 // pred_check_branch
      %167 = sbr.rel (0) target = $region41
    $region40: #{_qnetwork_forward_impl.1} parent=1 // pred_region
      %169 = dma.done [#allocation4], 32
    $region41: #{_qnetwork_forward_impl.1} parent=1 // pred_fallthru
      _
    %170 = vsyncpa [#allocation3], 1
    %171 = vsyncpa [#allocation4], 1

</llo_original>
